<compile_context>
chip_gen: v7x
topology: tpu7x:2x2x1
jax: 0.10.0
libtpu: 0.0.40
codegen_flags: <defaults>
</compile_context>

<pallas_src>
import functools

import jax
import jax.numpy as jnp
from jax import lax
from jax.experimental import pallas as pl
from jax.experimental.pallas import tpu as pltpu


def _round_up(x, m):
    return ((x + m - 1) // m) * m


def _estimate_vmem_bytes(tm, d, in_bpe):
    """Rough per-kernel VMEM footprint for a given Gram tile size."""
    zi = 2 * tm * d * in_bpe                       # row tile, double-buffered
    zjt = 2 * d * tm * in_bpe                      # col tile (Zn^T), double-buffered
    labs = 2 * (tm * 128 * 4) + 2 * (8 * tm * 4)   # lane/sublane-padded label blocks
    out = 8 * tm * 4                               # resident (1, tm) partials
    tmp = 3 * tm * tm * 4                          # Gram tile + sign + product (f32)
    return zi + zjt + labs + out + tmp


_VMEM_BUDGET_BYTES = 24 * 1024 * 1024   # conservative: leaves headroom on v7x (64 MiB phys)


def _pick_tile(m, d, in_bpe):
    """Largest lane-aligned Gram tile that fits the VMEM budget."""
    m8 = _round_up(m, 8)
    if m8 <= 128:
        return m8                       # single full-extent tile
    for tm in (512, 256, 128):
        if tm <= m8 and _estimate_vmem_bytes(tm, d, in_bpe) <= _VMEM_BUDGET_BYTES:
            return tm
    return 128                          # minimum lane-aligned tile (see TODO on K-tiling)


def _gram_loss_kernel(imap_ref, jmap_ref, wmap_ref,        # scalar-prefetch (SMEM)
                      zi_ref, zjt_ref, li_ref, lj_ref,     # inputs (VMEM)
                      out_ref,                             # (1, 1, tm) resident partials
                      *, steps_per_core):
    c = pl.program_id(0)   # core chunk ("parallel")
    k = pl.program_id(1)   # step within chunk ("arbitrary")

    @pl.when(k == 0)
    def _init():
        out_ref[...] = jnp.zeros_like(out_ref)

    # Tile weight: 1 for diagonal tiles, 2 for off-diagonal (symmetry), 0 for
    # the (at most one) padded schedule entry.
    w = wmap_ref[c * steps_per_core + k].astype(jnp.float32)

    # Gram tile in canonical (tm, D) x (D, tm) MXU form, f32 accumulation.
    g = jnp.dot(zi_ref[...], zjt_ref[...],
                preferred_element_type=jnp.float32)            # (tm, tm) f32

    # where(C, 1-G, 1+G) == 1 + s*G with s = +1 (different class) / -1 (same).
    sgn = 1.0 - 2.0 * (li_ref[...] == lj_ref[...]).astype(jnp.float32)   # (tm, tm)

    # Reduce only along the sublane axis; the cross-lane reduce happens once
    # outside the kernel.
    out_ref[...] += (w * jnp.sum(sgn * g, axis=0, keepdims=True))[None]   # (1, 1, tm)


def cosine_similarity_loss(Z, class_labels, *, use_bf16_mxu=True):
    """Pallas implementation of CosineSimilarityLoss.forward(Z, class_labels).

    With use_bf16_mxu=True (default) the Gram matmul runs with bf16 operands
    and f32 accumulation (~1e-3 relative error on the loss); pass False for a
    bit-faithful f32 path.
    """
    M, D = Z.shape
    mxu_dtype = jnp.bfloat16 if use_bf16_mxu else jnp.float32
    in_bpe = 2 if use_bf16_mxu else 4

    # --- One-shot row normalization (O(M*D)); F.normalize(p=2, dim=1, eps=1e-12):
    #     z / max(||z||, 1e-12) == z * rsqrt(max(||z||^2, 1e-24)) in f32.
    Zf = Z.astype(jnp.float32)
    inv = lax.rsqrt(jnp.maximum(jnp.sum(Zf * Zf, axis=1, keepdims=True), 1e-24))
    Zn = (Zf * inv).astype(mxu_dtype)                      # (M, D)

    # --- Tile selection + zero-row padding (pad rows normalize to 0 => they
    #     contribute exactly 0 to sum(s*G); the "+1" constant uses the true M).
    tm = _pick_tile(M, D, in_bpe)
    n_t = pl.cdiv(M, tm)
    Mp = n_t * tm
    labels_i32 = class_labels.astype(jnp.int32)
    if Mp != M:
        Zn = jnp.pad(Zn, ((0, Mp - M), (0, 0)))
        labels_i32 = jnp.pad(labels_i32, (0, Mp - M), constant_values=-1)

    ZnT = Zn.T                                             # (D, Mp) canonical MXU feed
    lab_col = labels_i32.reshape(Mp, 1)
    lab_row = labels_i32.reshape(1, Mp)

    # --- Flattened upper-triangular tile schedule (row-major => the row tile
    #     block index is constant within a row and is not re-DMA'd), split into
    #     two equal contiguous chunks for the v7x megacore "parallel" axis.
    tri = [(i, j) for i in range(n_t) for j in range(i, n_t)]
    n_tiles = len(tri)
    n_cores = 2
    steps_per_core = pl.cdiv(n_tiles, n_cores)
    pad_steps = n_cores * steps_per_core - n_tiles
    weights = [1 if i == j else 2 for (i, j) in tri] + [0] * pad_steps
    tri = tri + [tri[-1]] * pad_steps                      # in-range dummy tiles, weight 0
    imap = jnp.asarray([ij[0] for ij in tri], dtype=jnp.int32)
    jmap = jnp.asarray([ij[1] for ij in tri], dtype=jnp.int32)
    wmap = jnp.asarray(weights, dtype=jnp.int32)

    est = _estimate_vmem_bytes(tm, D, in_bpe)
    vmem_limit = int(min(max(2 * est, 32 * 1024 * 1024), 56 * 1024 * 1024))

    spc = steps_per_core   # captured by the index_maps below

    partials = pl.pallas_call(
        functools.partial(_gram_loss_kernel, steps_per_core=spc),
        out_shape=jax.ShapeDtypeStruct((n_cores, 1, tm), jnp.float32),
        grid_spec=pltpu.PrefetchScalarGridSpec(
            num_scalar_prefetch=3,
            grid=(n_cores, spc),
            in_specs=[
                pl.BlockSpec((tm, D), lambda c, k, im, jm, wm: (im[c * spc + k], 0)),
                pl.BlockSpec((D, tm), lambda c, k, im, jm, wm: (0, jm[c * spc + k])),
                pl.BlockSpec((tm, 1), lambda c, k, im, jm, wm: (im[c * spc + k], 0)),
                pl.BlockSpec((1, tm), lambda c, k, im, jm, wm: (0, jm[c * spc + k])),
            ],
            out_specs=pl.BlockSpec((1, 1, tm), lambda c, k, im, jm, wm: (c, 0, 0)),
        ),
        compiler_params=pltpu.CompilerParams(
            dimension_semantics=("parallel", "arbitrary"),
            vmem_limit_bytes=vmem_limit),
    )(imap, jmap, wmap, Zn, ZnT, lab_col, lab_row)

    # Final cross-lane reduce + analytic constant + 1/M^2 scale (the sum of the
    # per-pair "1" terms over the true M^2 pairs is exactly M^2).
    return 1.0 + jnp.sum(partials) / float(M * M)


def _reference(Z, class_labels):
    Zf = Z.astype(jnp.float32)
    norm = jnp.sqrt(jnp.sum(Zf * Zf, axis=1, keepdims=True))
    Zn = Zf / jnp.maximum(norm, 1e-12)
    G = Zn @ Zn.T
    M = G.shape[0]
    C = class_labels[None, :] == class_labels[:, None]
    G = jnp.where(C, 1.0 - G, 1.0 + G)
    return jnp.sum(G) / (M ** 2)


if __name__ == "__main__":
    key = jax.random.PRNGKey(0)
    k1, k2, k3, k4 = jax.random.split(key, 4)

    # Shape matching the module's usage in the autoencoder (batch=8, hidden=32).
    M, D = 8, 32
    Z = jax.random.normal(k1, (M, D), dtype=jnp.float32)
    labels = jax.random.randint(k2, (M,), 0, 3, dtype=jnp.int32)
    ref = _reference(Z, labels)

    loss_f32 = jax.block_until_ready(cosine_similarity_loss(Z, labels, use_bf16_mxu=False))
    assert jnp.allclose(loss_f32, ref, atol=1e-4, rtol=1e-4), (loss_f32, ref)

    loss_bf16 = jax.block_until_ready(cosine_similarity_loss(Z, labels))  # bf16 default
    assert jnp.allclose(loss_bf16, ref, atol=2e-2, rtol=2e-2), (loss_bf16, ref)

    # Irregular M exercises zero-row padding + the flattened triangular schedule
    # (M=200 -> tm=128, Mp=256 -> 2x2 row/col tiles -> 3 triangular tiles split
    # across the two-core "parallel" axis, off-diagonal tile weighted 2x).
    M2, D2 = 200, 64
    Z2 = jax.random.normal(k3, (M2, D2), dtype=jnp.float32)
    labels2 = jax.random.randint(k4, (M2,), 0, 5, dtype=jnp.int32)
    ref2 = _reference(Z2, labels2)

    loss2_f32 = jax.block_until_ready(cosine_similarity_loss(Z2, labels2, use_bf16_mxu=False))
    assert jnp.allclose(loss2_f32, ref2, atol=1e-4, rtol=1e-4), (loss2_f32, ref2)

    loss2_bf16 = jax.block_until_ready(cosine_similarity_loss(Z2, labels2))
    assert jnp.allclose(loss2_bf16, ref2, atol=2e-2, rtol=2e-2), (loss2_bf16, ref2)

    print("KERNEL_OK")
</pallas_src>

<mosaic_0001>
module attributes {stable_mosaic.version = 11 : i64} {
  func.func @_gram_loss_kernel(%arg0: i32, %arg1: i32, %arg2: memref<2xi32, #tpu.memory_space<smem>>, %arg3: memref<2xi32, #tpu.memory_space<smem>>, %arg4: memref<2xi32, #tpu.memory_space<smem>>, %arg5: memref<8x32xf32, #tpu.memory_space<vmem>>, %arg6: memref<32x8xf32, #tpu.memory_space<vmem>>, %arg7: memref<8x1xi32, #tpu.memory_space<vmem>>, %arg8: memref<1x8xi32, #tpu.memory_space<vmem>>, %arg9: memref<1x1x8xf32, #tpu.memory_space<vmem>>) attributes {dimension_semantics = [#tpu.dimension_semantics<parallel>, #tpu.dimension_semantics<arbitrary>], iteration_bounds = array<i64: 2, 1>, scalar_prefetch = 3 : i64, scratch_operands = 0 : i64, tpu.core_type = #tpu.core_type<tc>, window_params = [{transform_indices = @transform_0, window_bounds = array<i64: 8, 32>}, {transform_indices = @transform_1, window_bounds = array<i64: 32, 8>}, {transform_indices = @transform_2, window_bounds = array<i64: 8, 1>}, {transform_indices = @transform_3, window_bounds = array<i64: 1, 8>}, {transform_indices = @transform_4, window_bounds = array<i64: 1, 1, 8>}]} {
    %c0_i32 = arith.constant 0 : i32
    %0 = arith.cmpi eq, %arg1, %c0_i32 : i32
    %1 = arith.extui %0 : i1 to i32
    %c0_i32_0 = arith.constant 0 : i32
    %2 = arith.cmpi ne, %1, %c0_i32_0 : i32
    scf.if %2 {
      %cst_17 = arith.constant 0.000000e+00 : f32
      %31 = vector.broadcast %cst_17 : f32 to vector<1x1x8xf32>
      %c0_18 = arith.constant 0 : index
      %c0_19 = arith.constant 0 : index
      %c0_20 = arith.constant 0 : index
      %32 = vector.load %arg9[%c0_18, %c0_19, %c0_20] : memref<1x1x8xf32, #tpu.memory_space<vmem>>, vector<1x1x8xf32>
      tpu.vector_store %arg9[%c0_18, %c0_19, %c0_20], %31 {strides = array<i32>} : memref<1x1x8xf32, #tpu.memory_space<vmem>>, vector<1x1x8xf32>,
    } else {
    }
    %c1_i32 = arith.constant 1 : i32
    %3 = arith.muli %arg0, %c1_i32 : i32
    %4 = arith.addi %3, %arg1 : i32
    %5 = arith.index_cast %4 : i32 to index
    %6 = memref.load %arg4[%5] : memref<2xi32, #tpu.memory_space<smem>>
    %7 = arith.sitofp %6 : i32 to f32
    %c0 = arith.constant 0 : index
    %c0_1 = arith.constant 0 : index
    %8 = vector.load %arg5[%c0, %c0_1] : memref<8x32xf32, #tpu.memory_space<vmem>>, vector<8x32xf32>
    %c0_2 = arith.constant 0 : index
    %c0_3 = arith.constant 0 : index
    %9 = vector.load %arg6[%c0_2, %c0_3] : memref<32x8xf32, #tpu.memory_space<vmem>>, vector<32x8xf32>
    %cst = arith.constant dense<0.000000e+00> : vector<8x8xf32>
    %10 = tpu.matmul %8, %9, %cst {dimension_numbers = #tpu.dot_dimension_numbers<[1], [0], [0], [1], [0, 0, 1, 1], [], []>} : vector<8x32xf32>, vector<32x8xf32>, vector<8x8xf32> -> vector<8x8xf32>
    %c0_4 = arith.constant 0 : index
    %c0_5 = arith.constant 0 : index
    %11 = vector.load %arg7[%c0_4, %c0_5] : memref<8x1xi32, #tpu.memory_space<vmem>>, vector<8x1xi32>
    %c0_6 = arith.constant 0 : index
    %c0_7 = arith.constant 0 : index
    %12 = vector.load %arg8[%c0_6, %c0_7] : memref<1x8xi32, #tpu.memory_space<vmem>>, vector<1x8xi32>
    %13 = vector.broadcast %11 : vector<8x1xi32> to vector<8x8xi32>
    %14 = vector.broadcast %12 : vector<1x8xi32> to vector<8x8xi32>
    %15 = arith.cmpi eq, %13, %14 : vector<8x8xi32>
    %16 = arith.extui %15 : vector<8x8xi1> to vector<8x8xi32>
    %17 = arith.sitofp %16 : vector<8x8xi32> to vector<8x8xf32>
    %cst_8 = arith.constant 2.000000e+00 : f32
    %18 = vector.broadcast %cst_8 : f32 to vector<8x8xf32>
    %19 = arith.mulf %18, %17 : vector<8x8xf32>
    %cst_9 = arith.constant 1.000000e+00 : f32
    %20 = vector.broadcast %cst_9 : f32 to vector<8x8xf32>
    %21 = arith.subf %20, %19 : vector<8x8xf32>
    %c0_10 = arith.constant 0 : index
    %c0_11 = arith.constant 0 : index
    %c0_12 = arith.constant 0 : index
    %22 = vector.load %arg9[%c0_10, %c0_11, %c0_12] : memref<1x1x8xf32, #tpu.memory_space<vmem>>, vector<1x1x8xf32>
    %23 = arith.mulf %21, %10 : vector<8x8xf32>
    %cst_13 = arith.constant dense<0.000000e+00> : vector<8xf32>
    %24 = vector.multi_reduction <add>, %23, %cst_13 [0] : vector<8x8xf32> to vector<8xf32>
    %25 = vector.shape_cast %24 : vector<8xf32> to vector<1x8xf32>
    %26 = vector.broadcast %7 : f32 to vector<1x8xf32>
    %27 = arith.mulf %26, %25 : vector<1x8xf32>
    %28 = vector.shape_cast %27 : vector<1x8xf32> to vector<1x1x8xf32>
    %29 = arith.addf %22, %28 : vector<1x1x8xf32>
    %c0_14 = arith.constant 0 : index
    %c0_15 = arith.constant 0 : index
    %c0_16 = arith.constant 0 : index
    %30 = vector.load %arg9[%c0_14, %c0_15, %c0_16] : memref<1x1x8xf32, #tpu.memory_space<vmem>>, vector<1x1x8xf32>
    tpu.vector_store %arg9[%c0_14, %c0_15, %c0_16], %29 {strides = array<i32>} : memref<1x1x8xf32, #tpu.memory_space<vmem>>, vector<1x1x8xf32>,
    return
  }
  func.func @transform_0(%arg0: i32, %arg1: i32, %arg2: memref<2xi32, #tpu.memory_space<smem>>, %arg3: memref<2xi32, #tpu.memory_space<smem>>, %arg4: memref<2xi32, #tpu.memory_space<smem>>) -> (i32, i32) {
    %c1_i32 = arith.constant 1 : i32
    %0 = arith.muli %arg0, %c1_i32 : i32
    %1 = arith.addi %0, %arg1 : i32
    %2 = arith.index_cast %1 : i32 to index
    %3 = memref.load %arg2[%2] : memref<2xi32, #tpu.memory_space<smem>>
    %c0_i32 = arith.constant 0 : i32
    %c0_i32_0 = arith.constant 0 : i32
    return %3, %c0_i32 : i32, i32
  }
  func.func @transform_1(%arg0: i32, %arg1: i32, %arg2: memref<2xi32, #tpu.memory_space<smem>>, %arg3: memref<2xi32, #tpu.memory_space<smem>>, %arg4: memref<2xi32, #tpu.memory_space<smem>>) -> (i32, i32) {
    %c1_i32 = arith.constant 1 : i32
    %0 = arith.muli %arg0, %c1_i32 : i32
    %1 = arith.addi %0, %arg1 : i32
    %2 = arith.index_cast %1 : i32 to index
    %3 = memref.load %arg3[%2] : memref<2xi32, #tpu.memory_space<smem>>
    %c0_i32 = arith.constant 0 : i32
    %c0_i32_0 = arith.constant 0 : i32
    return %c0_i32, %3 : i32, i32
  }
  func.func @transform_2(%arg0: i32, %arg1: i32, %arg2: memref<2xi32, #tpu.memory_space<smem>>, %arg3: memref<2xi32, #tpu.memory_space<smem>>, %arg4: memref<2xi32, #tpu.memory_space<smem>>) -> (i32, i32) {
    %c1_i32 = arith.constant 1 : i32
    %0 = arith.muli %arg0, %c1_i32 : i32
    %1 = arith.addi %0, %arg1 : i32
    %2 = arith.index_cast %1 : i32 to index
    %3 = memref.load %arg2[%2] : memref<2xi32, #tpu.memory_space<smem>>
    %c0_i32 = arith.constant 0 : i32
    %c0_i32_0 = arith.constant 0 : i32
    return %3, %c0_i32 : i32, i32
  }
  func.func @transform_3(%arg0: i32, %arg1: i32, %arg2: memref<2xi32, #tpu.memory_space<smem>>, %arg3: memref<2xi32, #tpu.memory_space<smem>>, %arg4: memref<2xi32, #tpu.memory_space<smem>>) -> (i32, i32) {
    %c1_i32 = arith.constant 1 : i32
    %0 = arith.muli %arg0, %c1_i32 : i32
    %1 = arith.addi %0, %arg1 : i32
    %2 = arith.index_cast %1 : i32 to index
    %3 = memref.load %arg3[%2] : memref<2xi32, #tpu.memory_space<smem>>
    %c0_i32 = arith.constant 0 : i32
    %c0_i32_0 = arith.constant 0 : i32
    return %c0_i32, %3 : i32, i32
  }
  func.func @transform_4(%arg0: i32, %arg1: i32, %arg2: memref<2xi32, #tpu.memory_space<smem>>, %arg3: memref<2xi32, #tpu.memory_space<smem>>, %arg4: memref<2xi32, #tpu.memory_space<smem>>) -> (i32, i32, i32) {
    %c0_i32 = arith.constant 0 : i32
    %c0_i32_0 = arith.constant 0 : i32
    %c0_i32_1 = arith.constant 0 : i32
    return %arg0, %c0_i32, %c0_i32_0 : i32, i32, i32
  }
}

</mosaic_0001>

<llo_original>
// kernel: tpu_custom_call.1
$region0: #{tpu_custom_call.1}
  #allocation0 [shape = 'u32[]', space=smem, size = 0x4, offset = 0x4, fixed_abs, tag = 'smem constant byte address 0x4 - core index']
  #allocation1 [shape = 'u32[144,128]{1,0:T(1,128)}', space=vmem, size = 0x12000, scoped, tag = 'internal scratch']
  #allocation2 [shape = 's32[1]{0}', space=sflag, size = 0x4, scoped, tag = 'scoped memory for tpu_custom_call.1']
  #allocation3 [shape = 'u8[512]{0}', space=smem, size = 0x200, scoped, tag = 'prefetched SMEM operand 0']
  #allocation4 [shape = 'u8[512]{0}', space=smem, size = 0x200, scoped, tag = 'prefetched SMEM operand 1']
  #allocation5 [shape = 'u8[512]{0}', space=smem, size = 0x200, scoped, tag = 'prefetched SMEM operand 2']
  %s0 = inlined_call_operand.vmem [shape: s32[2], index: 0, kind: input, shape index: {}]
  %s1 = inlined_call_operand.vmem [shape: s32[2], index: 1, kind: input, shape index: {}]
  %s2 = inlined_call_operand.vmem [shape: s32[2], index: 2, kind: input, shape index: {}]
  %s3 = inlined_call_operand.vmem [shape: f32[8,32], index: 3, kind: input, shape index: {}]
  %s4 = inlined_call_operand.vmem [shape: f32[32,8], index: 4, kind: input, shape index: {}]
  %s5 = inlined_call_operand.vmem [shape: s32[8,1], index: 5, kind: input, shape index: {}]
  %s6 = inlined_call_operand.vmem [shape: s32[1,8], index: 6, kind: input, shape index: {}]
  %s7 = inlined_call_operand.hbm [shape: f32[2,1,8], index: 7, kind: output, shape index: {}]
  %s8 = sld [smem:[#allocation0]]
  $region53: #{tpu_custom_call.1} parent=0
    _
  %s10 = ssub.s32 1, %s8
  %s11 = scalar_select 0, %s10, %s8
  %s12 = sshll.u32 %s0, 4
  %s13 = int_to_ptr.vmem [resolvable:$true] %s12
  %15 = dma.vmem_to_smem %s13, 16, [#allocation3], [#allocation2]
  %s16 = sshll.u32 %s1, 4
  %s17 = int_to_ptr.vmem [resolvable:$true] %s16
  %19 = dma.vmem_to_smem %s17, 16, [#allocation4], [#allocation2]
  %s20 = sshll.u32 %s2, 4
  %s21 = int_to_ptr.vmem [resolvable:$true] %s20
  %23 = dma.vmem_to_smem %s21, 16, [#allocation5], [#allocation2]
  %24 = dma.done [#allocation2], 48
  %25 = sfence
  $region1: #{tpu_custom_call.1} parent=0
    #allocation6 [shape = 'u8[1024]{0}', space=vmem, size = 0x400, scoped, tag = 'output window, operand 0']
    #allocation7 [shape = 's32[2]{0}', space=sflag, size = 0x8, scoped, tag = 'scoped memory for tpu_custom_call.1']
    %26 = vsyncpa [#allocation7], 0
    %s27 = scalar_lea.sflag [#allocation7], 1
    %28 = vsyncpa %s27, 0
    loop: start=0, step=1, limit=4
    $region2: #{tpu_custom_call.1} parent=1 // loop_pre_header
      _
    $region3: #{tpu_custom_call.1} parent=1 // loop_header
      %s30 = sphi 0, %s34
      %p31 = scmp.ge.s32.totalorder %s30, 4
      %s37 = sphi 0, %s49
      %s38 = sphi 0, %s45
      %s39 = sphi 0, %s37
      %s40 = sphi 0, %s38
      %s41 = sphi 0, %s39
      %s42 = sphi 0, %s40
      %s56 = sphi 0, %s58
      %s59 = sphi 0, %s56
      %s60 = sphi 0, %s59
      %s76 = sphi 0, %s60
      %s86 = sphi 0, %s88
      %s89 = sphi 0, %s86
      %s90 = sphi 0, %s89
      %s106 = sphi 0, %s90
      %s116 = sphi 0, %s118
      %s119 = sphi 0, %s116
      %s120 = sphi 0, %s119
      %s136 = sphi 0, %s120
      %s146 = sphi 0, %s148
      %s149 = sphi 0, %s146
      %s150 = sphi 0, %s149
      %s166 = sphi 0, %s150
      %s172 = sphi 0, %s174
      %s175 = sphi 0, %s172
      %s176 = sphi 0, %s175
      %s192 = sphi 0, %s176
    $region4: #{tpu_custom_call.1} parent=1 // loop_header_branch
      %33 = sbr.rel (%p31) target = $region8
    $region5: #{tpu_custom_call.1} parent=1 // loop_body
      %s35 = ssub.s32 %s30, 1
      %s36 = ssub.s32 %s30, 2
      %s43 = sadd.s32 1, %s38
      %p44 = scmp.ge.s32.totalorder %s43, 1
      %s45 = scalar_select %p44, 0, %s43
      %s46 = sadd.s32 1, %s37
      %s47 = scalar_select %p44, %s46, %s37
      %p48 = scmp.ge.s32.totalorder %s47, 2
      %s49 = scalar_select %p48, 0, %s47
      %s50 = sadd.s32 %s37, %s38
      %s51 = sld [smem:[#allocation3 + %s50]]
      %s52 = sadd.s32 %s49, %s45
      %s53 = sld [smem:[#allocation3 + %s52]]
      %s54 = ssub.s32 %s51, %s53
      %p55 = scmp.eq.s32.totalorder %s54, 0
      %s57 = sadd.s32 %s56, 1
      %s58 = scalar_select %p55, %s56, %s57
      %p61 = pneg %p55
      %p62 = scmp.eq.s32.totalorder %s30, 1
      %p63 = por %p61, %p62
      %p64 = scmp.ne.s32.totalorder %s56, %s59
      %p65 = scmp.eq.s32.totalorder %s30, 0
      %p66 = por %p64, %p65
      %p67 = scmp.ne.s32.totalorder %s56, %s59
      %p68 = scmp.eq.s32.totalorder %s35, 1
      %p69 = por %p67, %p68
      %p70 = scmp.ne.s32.totalorder %s59, %s60
      %p71 = scmp.eq.s32.totalorder %s35, 0
      %p72 = por %p70, %p71
      %p73 = scmp.ne.s32.totalorder %s59, %s60
      %p74 = scmp.eq.s32.totalorder %s36, 1
      %p75 = por %p73, %p74
      %p77 = scmp.ne.s32.totalorder %s60, %s76
      %p78 = scmp.eq.s32.totalorder %s36, 0
      %p79 = por %p77, %p78
      %s80 = sadd.s32 %s37, %s38
      %s81 = sld [smem:[#allocation4 + %s80]]
      %s82 = sadd.s32 %s49, %s45
      %s83 = sld [smem:[#allocation4 + %s82]]
      %s84 = ssub.s32 %s81, %s83
      %p85 = scmp.eq.s32.totalorder %s84, 0
      %s87 = sadd.s32 %s86, 1
      %s88 = scalar_select %p85, %s86, %s87
      %p91 = pneg %p85
      %p92 = scmp.eq.s32.totalorder %s30, 1
      %p93 = por %p91, %p92
      %p94 = scmp.ne.s32.totalorder %s86, %s89
      %p95 = scmp.eq.s32.totalorder %s30, 0
      %p96 = por %p94, %p95
      %p97 = scmp.ne.s32.totalorder %s86, %s89
      %p98 = scmp.eq.s32.totalorder %s35, 1
      %p99 = por %p97, %p98
      %p100 = scmp.ne.s32.totalorder %s89, %s90
      %p101 = scmp.eq.s32.totalorder %s35, 0
      %p102 = por %p100, %p101
      %p103 = scmp.ne.s32.totalorder %s89, %s90
      %p104 = scmp.eq.s32.totalorder %s36, 1
      %p105 = por %p103, %p104
      %p107 = scmp.ne.s32.totalorder %s90, %s106
      %p108 = scmp.eq.s32.totalorder %s36, 0
      %p109 = por %p107, %p108
      %s110 = sadd.s32 %s37, %s38
      %s111 = sld [smem:[#allocation3 + %s110]]
      %s112 = sadd.s32 %s49, %s45
      %s113 = sld [smem:[#allocation3 + %s112]]
      %s114 = ssub.s32 %s111, %s113
      %p115 = scmp.eq.s32.totalorder %s114, 0
      %s117 = sadd.s32 %s116, 1
      %s118 = scalar_select %p115, %s116, %s117
      %p121 = pneg %p115
      %p122 = scmp.eq.s32.totalorder %s30, 1
      %p123 = por %p121, %p122
      %p124 = scmp.ne.s32.totalorder %s116, %s119
      %p125 = scmp.eq.s32.totalorder %s30, 0
      %p126 = por %p124, %p125
      %p127 = scmp.ne.s32.totalorder %s116, %s119
      %p128 = scmp.eq.s32.totalorder %s35, 1
      %p129 = por %p127, %p128
      %p130 = scmp.ne.s32.totalorder %s119, %s120
      %p131 = scmp.eq.s32.totalorder %s35, 0
      %p132 = por %p130, %p131
      %p133 = scmp.ne.s32.totalorder %s119, %s120
      %p134 = scmp.eq.s32.totalorder %s36, 1
      %p135 = por %p133, %p134
      %p137 = scmp.ne.s32.totalorder %s120, %s136
      %p138 = scmp.eq.s32.totalorder %s36, 0
      %p139 = por %p137, %p138
      %s140 = sadd.s32 %s37, %s38
      %s141 = sld [smem:[#allocation4 + %s140]]
      %s142 = sadd.s32 %s49, %s45
      %s143 = sld [smem:[#allocation4 + %s142]]
      %s144 = ssub.s32 %s141, %s143
      %p145 = scmp.eq.s32.totalorder %s144, 0
      %s147 = sadd.s32 %s146, 1
      %s148 = scalar_select %p145, %s146, %s147
      %p151 = pneg %p145
      %p152 = scmp.eq.s32.totalorder %s30, 1
      %p153 = por %p151, %p152
      %p154 = scmp.ne.s32.totalorder %s146, %s149
      %p155 = scmp.eq.s32.totalorder %s30, 0
      %p156 = por %p154, %p155
      %p157 = scmp.ne.s32.totalorder %s146, %s149
      %p158 = scmp.eq.s32.totalorder %s35, 1
      %p159 = por %p157, %p158
      %p160 = scmp.ne.s32.totalorder %s149, %s150
      %p161 = scmp.eq.s32.totalorder %s35, 0
      %p162 = por %p160, %p161
      %p163 = scmp.ne.s32.totalorder %s149, %s150
      %p164 = scmp.eq.s32.totalorder %s36, 1
      %p165 = por %p163, %p164
      %p167 = scmp.ne.s32.totalorder %s150, %s166
      %p168 = scmp.eq.s32.totalorder %s36, 0
      %p169 = por %p167, %p168
      %s170 = ssub.s32 %s37, %s49
      %p171 = scmp.eq.s32.totalorder %s170, 0
      %s173 = sadd.s32 %s172, 1
      %s174 = scalar_select %p171, %s172, %s173
      %p177 = pneg %p171
      %p178 = scmp.eq.s32.totalorder %s30, 1
      %p179 = por %p177, %p178
      %p180 = scmp.ne.s32.totalorder %s172, %s175
      %p181 = scmp.eq.s32.totalorder %s30, 0
      %p182 = por %p180, %p181
      %p183 = scmp.ne.s32.totalorder %s172, %s175
      %p184 = scmp.eq.s32.totalorder %s35, 1
      %p185 = por %p183, %p184
      %p186 = scmp.ne.s32.totalorder %s175, %s176
      %p187 = scmp.eq.s32.totalorder %s35, 0
      %p188 = por %p186, %p187
      %p189 = scmp.ne.s32.totalorder %s175, %s176
      %p190 = scmp.eq.s32.totalorder %s36, 1
      %p191 = por %p189, %p190
      %p193 = scmp.ne.s32.totalorder %s176, %s192
      %p194 = scmp.eq.s32.totalorder %s36, 0
      %p195 = por %p193, %p194
      %p196 = scmp.le.s32.totalorder 1, %s30
      %p197 = scmp.lt.s32.totalorder %s30, 3
      %p198 = pnand %p196, %p197
      %p199 = pneg %p198
      // Predicated region
      $region9: #{tpu_custom_call.1} parent=5 // pred_check
        _
      $region10: #{tpu_custom_call.1} parent=5 // pred_check_branch
        %201 = sbr.rel (%p198) target = $region12
      $region11: #{tpu_custom_call.1} parent=5 // pred_region
        %s202 = ssub.s32 %s30, 1
      $region12: #{tpu_custom_call.1} parent=5 // pred_fallthru
        _
      %p203 = scmp.lt.s32.totalorder %s30, 2
      // Predicated region
      $region13: #{tpu_custom_call.1} parent=5 // pred_check
        %p204 = pneg %p203
      $region14: #{tpu_custom_call.1} parent=5 // pred_check_branch
        %206 = sbr.rel (%p204) target = $region16
      $region15: #{tpu_custom_call.1} parent=5 // pred_region
        // Predicated region
        $region17: #{tpu_custom_call.1} parent=15 // pred_check
          %p207 = pneg %p66
        $region18: #{tpu_custom_call.1} parent=15 // pred_check_branch
          %209 = sbr.rel (%p207) target = $region20
        $region19: #{tpu_custom_call.1} parent=15 // pred_region
          %s210 = sadd.s32 %s37, %s38
          %s211 = sld [smem:[#allocation3 + %s210]]
          %p212 = scmp.lt.s32.totalorder %s211, 0
          %s213 = scalar_select %p212, %s211, 0
          %s214 = smul.addr %s213, 8
          %s215 = scalar_lea.vmem %s3, %s214
          %s216 = sadd.s32 %s37, %s38
          %s217 = sld [smem:[#allocation3 + %s216]]
        $region20: #{tpu_custom_call.1} parent=15 // pred_fallthru
          _
        // Predicated region
        $region21: #{tpu_custom_call.1} parent=15 // pred_check
          %p218 = pneg %p96
        $region22: #{tpu_custom_call.1} parent=15 // pred_check_branch
          %220 = sbr.rel (%p218) target = $region24
        $region23: #{tpu_custom_call.1} parent=15 // pred_region
          %s221 = sadd.s32 %s37, %s38
          %s222 = sld [smem:[#allocation4 + %s221]]
          %p223 = scmp.lt.s32.totalorder %s222, 0
          %s224 = scalar_select %p223, %s222, 0
          %s225 = smul.addr %s224, 8
          %s226 = scalar_lea.vmem %s4, %s225
          %s227 = sadd.s32 %s37, %s38
          %s228 = sld [smem:[#allocation4 + %s227]]
        $region24: #{tpu_custom_call.1} parent=15 // pred_fallthru
          _
        // Predicated region
        $region25: #{tpu_custom_call.1} parent=15 // pred_check
          %p229 = pneg %p126
        $region26: #{tpu_custom_call.1} parent=15 // pred_check_branch
          %231 = sbr.rel (%p229) target = $region28
        $region27: #{tpu_custom_call.1} parent=15 // pred_region
          %s232 = sadd.s32 %s37, %s38
          %s233 = sld [smem:[#allocation3 + %s232]]
          %p234 = scmp.lt.s32.totalorder %s233, 0
          %s235 = scalar_select %p234, %s233, 0
          %s236 = smul.addr %s235, 8
          %s237 = scalar_lea.vmem %s5, %s236
          %s238 = sadd.s32 %s37, %s38
          %s239 = sld [smem:[#allocation3 + %s238]]
        $region28: #{tpu_custom_call.1} parent=15 // pred_fallthru
          _
        // Predicated region
        $region29: #{tpu_custom_call.1} parent=15 // pred_check
          %p240 = pneg %p156
        $region30: #{tpu_custom_call.1} parent=15 // pred_check_branch
          %242 = sbr.rel (%p240) target = $region32
        $region31: #{tpu_custom_call.1} parent=15 // pred_region
          %s243 = sadd.s32 %s37, %s38
          %s244 = sld [smem:[#allocation4 + %s243]]
          %p245 = scmp.lt.s32.totalorder %s244, 0
          %s246 = scalar_select %p245, %s244, 0
          %s247 = scalar_lea.vmem %s6, %s246
          %s248 = sadd.s32 %s37, %s38
          %s249 = sld [smem:[#allocation4 + %s248]]
        $region32: #{tpu_custom_call.1} parent=15 // pred_fallthru
          _
      $region16: #{tpu_custom_call.1} parent=5 // pred_fallthru
        _
      %p250 = scmp.le.s32.totalorder 1, %s30
      %p251 = scmp.lt.s32.totalorder %s30, 3
      %p252 = pnand %p250, %p251
      %p253 = pneg %p252
      // Predicated region
      $region33: #{tpu_custom_call.1} parent=5 // pred_check
        _
      $region34: #{tpu_custom_call.1} parent=5 // pred_check_branch
        %255 = sbr.rel (%p252) target = $region36
      $region35: #{tpu_custom_call.1} parent=5 // pred_region
        %s256 = ssub.s32 %s30, 1
        %s257 = sadd.s32 %s39, %s40
        %s258 = sld [smem:[#allocation3 + %s257]]
        %p259 = scmp.lt.s32.totalorder %s258, 0
        %s260 = scalar_select %p259, %s258, 0
        %s261 = smul.addr %s260, 8
        %s262 = scalar_lea.vmem %s3, %s261
        %p263 = pneg %p72
        %p264 = pneg %p69
        %s265 = sadd.s32 %s39, %s40
        %s266 = sld [smem:[#allocation4 + %s265]]
        %p267 = scmp.lt.s32.totalorder %s266, 0
        %s268 = scalar_select %p267, %s266, 0
        %s269 = smul.addr %s268, 8
        %s270 = scalar_lea.vmem %s4, %s269
        %p271 = pneg %p102
        %p272 = pneg %p99
        %s273 = sadd.s32 %s39, %s40
        %s274 = sld [smem:[#allocation3 + %s273]]
        %p275 = scmp.lt.s32.totalorder %s274, 0
        %s276 = scalar_select %p275, %s274, 0
        %s277 = smul.addr %s276, 8
        %s278 = scalar_lea.vmem %s5, %s277
        %p279 = pneg %p132
        %p280 = pneg %p129
        %s281 = sadd.s32 %s39, %s40
        %s282 = sld [smem:[#allocation4 + %s281]]
        %p283 = scmp.lt.s32.totalorder %s282, 0
        %s284 = scalar_select %p283, %s282, 0
        %s285 = scalar_lea.vmem %s6, %s284
        %p286 = pneg %p162
        %p287 = pneg %p159
        %p288 = pneg %p188
        %p289 = pneg %p185
        %s290 = sand.u32 %s175, 1
        %s291 = scalar_lea.sflag [#allocation7], %s290
        %s292 = sand.u32 %s175, 1
        %s293 = scalar_lea.vmem [#allocation6], %s292
        %s294 = sadd.s32 %s39, %s40
        %s295 = sld [smem:[#allocation3 + %s294]]
        %p296 = scmp.lt.s32.totalorder %s295, 0
        %s297 = scalar_select %p296, %s295, 0
        %s298 = smul.addr %s297, 8
        %s299 = scalar_lea.vmem %s3, %s298
        %s300 = sadd.s32 %s39, %s40
        %s301 = sld [smem:[#allocation3 + %s300]]
        %s302 = sadd.s32 %s39, %s40
        %s303 = sld [smem:[#allocation4 + %s302]]
        %p304 = scmp.lt.s32.totalorder %s303, 0
        %s305 = scalar_select %p304, %s303, 0
        %s306 = smul.addr %s305, 8
        %s307 = scalar_lea.vmem %s4, %s306
        %s308 = sadd.s32 %s39, %s40
        %s309 = sld [smem:[#allocation4 + %s308]]
        %s310 = sadd.s32 %s39, %s40
        %s311 = sld [smem:[#allocation3 + %s310]]
        %p312 = scmp.lt.s32.totalorder %s311, 0
        %s313 = scalar_select %p312, %s311, 0
        %s314 = smul.addr %s313, 8
        %s315 = scalar_lea.vmem %s5, %s314
        %s316 = sadd.s32 %s39, %s40
        %s317 = sld [smem:[#allocation3 + %s316]]
        %s318 = sadd.s32 %s39, %s40
        %s319 = sld [smem:[#allocation4 + %s318]]
        %p320 = scmp.lt.s32.totalorder %s319, 0
        %s321 = scalar_select %p320, %s319, 0
        %s322 = scalar_lea.vmem %s6, %s321
        %s323 = sadd.s32 %s39, %s40
        %s324 = sld [smem:[#allocation4 + %s323]]
        %p325 = scmp.eq.s32.totalorder %s40, 0
        // Predicated region
        $region37: #{tpu_custom_call.1} parent=35 // pred_check
          %p326 = pneg %p325
        $region38: #{tpu_custom_call.1} parent=35 // pred_check_branch
          %328 = sbr.rel (%p326) target = $region40
        $region39: #{tpu_custom_call.1} parent=35 // pred_region
          %vm329 = vcmask 57344
          %330 = vst.msk [vmem:[%s293] sm:$0x1] %vm329, 0.0
        $region40: #{tpu_custom_call.1} parent=35 // pred_fallthru
          _
        %s331 = sadd.s32 %s39, %s40
        %s332 = sld [smem:[#allocation5 + %s331]]
        %s333 = scvt.s32.f32 %s332
        %v334 = vld [vmem:[%s299] sm:$0xff]
        %v335 = vld [vmem:[%s307] sm:$0xff]
        %v336 = vld [vmem:[%s307 + $0x8] sm:$0xff]
        %v337 = vld [vmem:[%s307 + $0x10] sm:$0xff]
        %v338 = vld [vmem:[%s307 + $0x18] sm:$0xff]
        %vm339 = vcmask 261120
        %v341 = vsel %vm339, %v334, 0
        %343 = vmatprep.subr.mxu0 0.0
        %344 = vmatpush1.msra.mxu0 %v335
        %345 = vmatprep.subr.mxu0 0.0
        %346 = vmatpush1.msra.mxu0 %v336
        %347 = vmatprep.subr.mxu0 0.0
        %348 = vmatpush1.msra.mxu0 %v337
        %349 = vmatprep.subr.mxu0 0.0
        %350 = vmatpush1.msra.mxu0 %v338
        %351 = vmatprep.subr.mxu0 0.0
        %352 = vmatpush1.msra.mxu0 0.0
        %353 = vmatprep.subr.mxu0 0.0
        %354 = vmatpush1.msra.mxu0 0.0
        %355 = vmatprep.subr.mxu0 0.0
        %356 = vmatpush1.msra.mxu0 0.0
        %357 = vmatprep.subr.mxu0 0.0
        %358 = vmatpush1.msra.mxu0 0.0
        %359 = vmatprep.subr.mxu0 0.0
        %360 = vmatpush1.msra.mxu0 0.0
        %361 = vmatprep.subr.mxu0 0.0
        %362 = vmatpush1.msra.mxu0 0.0
        %363 = vmatprep.subr.mxu0 0.0
        %364 = vmatpush1.msra.mxu0 0.0
        %365 = vmatprep.subr.mxu0 0.0
        %366 = vmatpush1.msra.mxu0 0.0
        %367 = vmatprep.subr.mxu0 0.0
        %368 = vmatpush1.msra.mxu0 0.0
        %369 = vmatprep.subr.mxu0 0.0
        %370 = vmatpush1.msra.mxu0 0.0
        %371 = vmatprep.subr.mxu0 0.0
        %372 = vmatpush1.msra.mxu0 0.0
        %373 = vmatprep.subr.mxu0 0.0
        %374 = vmatpush1.msra.mxu0 0.0
        %375 = vmatprep.subr.mxu0 0.0
        %376 = vmatpush1.msra.mxu0 0.0
        %377 = vmatprep.subr.mxu0 0.0
        %378 = vmatpush1.msra.mxu0 0.0
        %379 = vmatprep.subr.mxu0 0.0
        %380 = vmatpush1.msra.mxu0 0.0
        %381 = vmatprep.subr.mxu0 0.0
        %382 = vmatpush1.msra.mxu0 0.0
        %383 = vmatprep.subr.mxu0 0.0
        %384 = vmatpush1.msra.mxu0 0.0
        %385 = vmatprep.subr.mxu0 0.0
        %386 = vmatpush1.msra.mxu0 0.0
        %387 = vmatprep.subr.mxu0 0.0
        %388 = vmatpush1.msra.mxu0 0.0
        %389 = vmatprep.subr.mxu0 0.0
        %390 = vmatpush1.msra.mxu0 0.0
        %391 = vmatprep.subr.mxu0 0.0
        %392 = vmatpush1.msra.mxu0 0.0
        %393 = vmatprep.subr.mxu0 0.0
        %394 = vmatpush1.msra.mxu0 0.0
        %395 = vmatprep.subr.mxu0 0.0
        %396 = vmatpush1.msra.mxu0 0.0
        %397 = vmatprep.subr.mxu0 0.0
        %398 = vmatpush1.msra.mxu0 0.0
        %399 = vmatprep.subr.mxu0 0.0
        %400 = vmatpush1.msra.mxu0 0.0
        %401 = vmatprep.subr.mxu0 0.0
        %402 = vmatpush1.msra.mxu0 0.0
        %403 = vmatprep.subr.mxu0 0.0
        %404 = vmatpush1.msra.mxu0 0.0
        %405 = vmatprep.subr.mxu0 0.0
        %406 = vmatpush1.msra.mxu0 0.0
        %407 = vmatprep.mubr.f32.mxu0 0.0
        %408 = vmatmul.mubr.f32.gmra.mrb[0].mxu0 %v341
        %v409 = vpop.f32.mrb[0].mxu0
        %v410 = vadd.f32 0.0, %v409
        %v411 = vpop.f32.mrb[0].mxu0
        %412 = vdwg.mxu0
        %v413 = vld [vmem:[%s315] sm:$0xff]
        %v414 = vld [vmem:[%s322] sm:$0x1]
        %415 = vset.pattern.permute.xlu0 0
        %416 = vperm.xlu0 %415, %v413
        %v417 = vpop.permute.xlu0 %416
        %v418 = vlaneseq
        %v419 = vshrl.u32 %v418, 7
        %v420 = vsub.s32 0, %v419
        %v421 = vrot.slane %v414, %v420
        %vm422 = vcmp.eq.s32.totalorder %v417, %v421
        %v423 = vsel %vm422, 1, 0
        %v424 = vcvt.s32.f32 %v423
        %v425 = vmul.f32 %v424, 2.0
        %v426 = vsub.f32 1.0, %v425
        %v427 = vld [vmem:[%s293] sm:$0x1]
        %v428 = vmul.f32 %v426, %v410
        %vm429 = vcmask 64512
        %v430 = vsel %vm429, %v428, 0.0
        %v431 = vrot.slane %v430, 4
        %v432 = vadd.f32 %v430, %v431
        %v433 = vrot.slane %v432, 2
        %v434 = vadd.f32 %v432, %v433
        %v435 = vrot.slane %v434, 1
        %v436 = vadd.f32 %v434, %v435
        %v437 = vstv %s333
        %v438 = vmul.f32 %v437, %v436
        %v439 = vadd.f32 %v427, %v438
        %vm440 = vcmask 57344
        %441 = vst.msk [vmem:[%s293] sm:$0x1] %vm440, %v439
        %s442 = sand.u32 %s175, 1
        %s443 = scalar_lea.sflag [#allocation7], %s442
        %s444 = sand.u32 %s175, 1
        %s445 = scalar_lea.vmem [#allocation6], %s444
        // Predicated region
        $region41: #{tpu_custom_call.1} parent=35 // pred_check
          %p446 = pneg %p185
        $region42: #{tpu_custom_call.1} parent=35 // pred_check_branch
          %448 = sbr.rel (%p446) target = $region44
        $region43: #{tpu_custom_call.1} parent=35 // pred_region
          %s450 = ssub.s32 16, 16
          %451 = vsyncadd %s443, %s450
          %s452 = smul.addr %s39, 16
          %s453 = scalar_lea.hbm %s7, %s452
          %s455 = sshll.u32 %s445, 4
          %s456 = int_to_ptr.vmem [resolvable:$true] %s455
          %458 = dma.vmem_to_hbm [thread:$0]  %s456, 16, %s453, %s443
        $region44: #{tpu_custom_call.1} parent=35 // pred_fallthru
          _
      $region36: #{tpu_custom_call.1} parent=5 // pred_fallthru
        _
      %p459 = scmp.le.s32.totalorder 2, %s30
      // Predicated region
      $region45: #{tpu_custom_call.1} parent=5 // pred_check
        %p460 = pneg %p459
      $region46: #{tpu_custom_call.1} parent=5 // pred_check_branch
        %462 = sbr.rel (%p460) target = $region48
      $region47: #{tpu_custom_call.1} parent=5 // pred_region
        %s463 = ssub.s32 %s30, 2
        // Predicated region
        $region49: #{tpu_custom_call.1} parent=47 // pred_check
          %p464 = pneg %p191
        $region50: #{tpu_custom_call.1} parent=47 // pred_check_branch
          %466 = sbr.rel (%p464) target = $region52
        $region51: #{tpu_custom_call.1} parent=47 // pred_region
          %s467 = sand.u32 %s176, 1
          %s468 = scalar_lea.sflag [#allocation7], %s467
          %s469 = sand.u32 %s176, 1
          %s470 = scalar_lea.vmem [#allocation6], %s469
          %471 = dma.done %s468, 16
        $region52: #{tpu_custom_call.1} parent=47 // pred_fallthru
          _
      $region48: #{tpu_custom_call.1} parent=5 // pred_fallthru
        _
    $region6: #{tpu_custom_call.1} parent=1 // loop_footer
      %s34 = sadd.s32 1, %s30
    $region7: #{tpu_custom_call.1} parent=1 // loop_footer_branch
      %29 = sbr.rel target = $region3
    $region8: #{tpu_custom_call.1} parent=1 // loop_exit
      _
    %472 = vsyncpa [#allocation7], 1
    %s473 = scalar_lea.sflag [#allocation7], 1
    %474 = vsyncpa %s473, 1

</llo_original>
